<compile_context>
chip_gen: v7x
topology: tpu7x:2x2x1
jax: 0.10.0
libtpu: 0.0.40
codegen_flags: <defaults>
</compile_context>

<pallas_src>
import jax
import jax.numpy as jnp
from jax.experimental import pallas as pl
from jax.experimental.pallas import tpu as pltpu

EPS = 1e-5
MOMENTUM = 0.1


def _pick_tile(dim, candidates):
    """Largest candidate that evenly divides `dim`; fall back to the full dim."""
    for c in candidates:
        if c <= dim and dim % c == 0:
            return c
    return dim


def _vmem_limit(n_rows, n_cols, itemsize):
    # ~2x double-buffered (N, TILE_C) in + out, params, plus headroom.
    needed = 6 * n_rows * n_cols * max(itemsize, 4) + (1 << 20)
    return int(min(max(needed, 8 << 20), 48 << 20))


# ----------------------------------------------------------------------------
# Training-mode forward: per-channel batch stats + normalize + fused EMA update.
# ----------------------------------------------------------------------------
def _bn_inv_train_kernel(x_ref, w_ref, b_ref, rm_ref, rv_ref,
                         y_ref, new_rm_ref, new_rv_ref):
    x = x_ref[...].astype(jnp.float32)                        # (N, TILE_C)
    mean = jnp.mean(x, axis=0, keepdims=True)                 # (1, TILE_C)
    centered = x - mean
    var = jnp.mean(centered * centered, axis=0, keepdims=True)  # biased var

    inv_std = jax.lax.rsqrt(var + EPS)                        # EUP
    scale = jnp.exp(w_ref[...].astype(jnp.float32)) * inv_std  # (1, TILE_C)
    shift = b_ref[...].astype(jnp.float32) - mean * scale

    y_ref[...] = (x * scale + shift).astype(y_ref.dtype)      # 1 mul + 1 add / elem

    # Fused EMA of running stats (biased var, exactly as BatchNormInv does).
    new_rm_ref[...] = ((1.0 - MOMENTUM) * rm_ref[...].astype(jnp.float32)
                       + MOMENTUM * mean).astype(new_rm_ref.dtype)
    new_rv_ref[...] = ((1.0 - MOMENTUM) * rv_ref[...].astype(jnp.float32)
                       + MOMENTUM * var).astype(new_rv_ref.dtype)


def batchnorm_inv_train(x, weight, bias, running_mean, running_var):
    """Training-mode forward. Returns (y, new_running_mean, new_running_var)."""
    N, C = x.shape
    tile_c = _pick_tile(C, (2048, 1024, 512, 256, 128))
    grid = (C // tile_c,)

    row_spec = pl.BlockSpec((1, tile_c), lambda j: (0, j))
    col_spec = pl.BlockSpec((N, tile_c), lambda j: (0, j))

    cost = pl.CostEstimate(
        flops=6 * N * C,
        transcendentals=2 * C,
        bytes_accessed=2 * N * C * x.dtype.itemsize + 6 * C * 4,
    )

    y, new_rm, new_rv = pl.pallas_call(
        _bn_inv_train_kernel,
        out_shape=(
            jax.ShapeDtypeStruct((N, C), x.dtype),
            jax.ShapeDtypeStruct((1, C), running_mean.dtype),
            jax.ShapeDtypeStruct((1, C), running_var.dtype),
        ),
        grid=grid,
        in_specs=[col_spec, row_spec, row_spec, row_spec, row_spec],
        out_specs=(col_spec, row_spec, row_spec),
        compiler_params=pltpu.CompilerParams(
            dimension_semantics=("parallel",),
            vmem_limit_bytes=_vmem_limit(N, tile_c, x.dtype.itemsize),
        ),
        cost_estimate=cost,
    )(x, weight, bias, running_mean, running_var)
    return y, new_rm, new_rv


# ----------------------------------------------------------------------------
# Eval-mode forward: pure elementwise, tiled over rows.
# ----------------------------------------------------------------------------
def _bn_inv_eval_kernel(x_ref, w_ref, b_ref, rm_ref, rv_ref, y_ref):
    x = x_ref[...].astype(jnp.float32)                        # (TILE_N, C)
    inv_std = jax.lax.rsqrt(rv_ref[...].astype(jnp.float32) + EPS)
    scale = jnp.exp(w_ref[...].astype(jnp.float32)) * inv_std
    shift = b_ref[...].astype(jnp.float32) - rm_ref[...].astype(jnp.float32) * scale
    y_ref[...] = (x * scale + shift).astype(y_ref.dtype)


def batchnorm_inv_eval(x, weight, bias, running_mean, running_var):
    """Eval-mode forward (uses running stats)."""
    N, C = x.shape
    tile_n = _pick_tile(N, (1024, 512, 256, 128, 64, 32, 16, 8))
    grid = (N // tile_n,)

    x_spec = pl.BlockSpec((tile_n, C), lambda i: (i, 0))
    p_spec = pl.BlockSpec((1, C), lambda i: (0, 0))

    cost = pl.CostEstimate(
        flops=2 * N * C,
        transcendentals=2 * C,
        bytes_accessed=2 * N * C * x.dtype.itemsize + 4 * C * 4,
    )

    return pl.pallas_call(
        _bn_inv_eval_kernel,
        out_shape=jax.ShapeDtypeStruct((N, C), x.dtype),
        grid=grid,
        in_specs=[x_spec, p_spec, p_spec, p_spec, p_spec],
        out_specs=x_spec,
        compiler_params=pltpu.CompilerParams(
            dimension_semantics=("parallel",),
            vmem_limit_bytes=_vmem_limit(tile_n, C, x.dtype.itemsize),
        ),
        cost_estimate=cost,
    )(x, weight, bias, running_mean, running_var)


if __name__ == "__main__":
    key = jax.random.PRNGKey(0)
    # Small but tiling-exercising shape: 2 lane-dense channel tiles of 128.
    N, C = 16, 256

    x = jax.random.normal(key, (N, C), dtype=jnp.float32)

    # Deterministic parameter init, exactly as BatchNormInv.__init__ / first_run:
    weight = jnp.zeros((1, C), dtype=jnp.float32)
    bias = jnp.zeros((1, C), dtype=jnp.float32)
    running_mean = jnp.zeros((1, C), dtype=jnp.float32)
    running_var = jnp.ones((1, C), dtype=jnp.float32)

    # --- training-mode forward ------------------------------------------------
    y, new_rm, new_rv = batchnorm_inv_train(x, weight, bias, running_mean, running_var)
    y = jax.block_until_ready(y)
    new_rm = jax.block_until_ready(new_rm)
    new_rv = jax.block_until_ready(new_rv)

    # Reference (plain-JAX transcription of the PyTorch module, training branch).
    mean_ref = jnp.mean(x, axis=0, keepdims=True)
    var_ref = jnp.var(x, axis=0, keepdims=True)  # biased (unbiased=False)
    y_ref = jnp.exp(weight) * (x - mean_ref) / jnp.sqrt(var_ref + EPS) + bias
    assert jnp.allclose(y, y_ref, atol=1e-5, rtol=1e-5), "train forward mismatch"
    assert jnp.allclose(new_rm, 0.9 * running_mean + 0.1 * mean_ref,
                        atol=1e-6, rtol=1e-6), "running_mean mismatch"
    assert jnp.allclose(new_rv, 0.9 * running_var + 0.1 * var_ref,
                        atol=1e-6, rtol=1e-6), "running_var mismatch"

    # --- eval-mode forward ----------------------------------------------------
    y_eval = batchnorm_inv_eval(x, weight, bias, new_rm, new_rv)
    y_eval = jax.block_until_ready(y_eval)
    y_eval_ref = jnp.exp(weight) * (x - new_rm) / jnp.sqrt(new_rv + EPS) + bias
    assert jnp.allclose(y_eval, y_eval_ref, atol=1e-5, rtol=1e-5), "eval forward mismatch"

    print("KERNEL_OK")
</pallas_src>

<mosaic_0001>
module attributes {stable_mosaic.version = 11 : i64} {
  func.func @_bn_inv_train_kernel(%arg0: i32, %arg1: memref<16x256xf32, #tpu.memory_space<vmem>>, %arg2: memref<1x256xf32, #tpu.memory_space<vmem>>, %arg3: memref<1x256xf32, #tpu.memory_space<vmem>>, %arg4: memref<1x256xf32, #tpu.memory_space<vmem>>, %arg5: memref<1x256xf32, #tpu.memory_space<vmem>>, %arg6: memref<16x256xf32, #tpu.memory_space<vmem>>, %arg7: memref<1x256xf32, #tpu.memory_space<vmem>>, %arg8: memref<1x256xf32, #tpu.memory_space<vmem>>) attributes {dimension_semantics = [#tpu.dimension_semantics<parallel>], iteration_bounds = array<i64: 1>, scalar_prefetch = 0 : i64, scratch_operands = 0 : i64, tpu.core_type = #tpu.core_type<tc>, window_params = [{transform_indices = @transform_0, window_bounds = array<i64: 16, 256>}, {transform_indices = @transform_1, window_bounds = array<i64: 1, 256>}, {transform_indices = @transform_2, window_bounds = array<i64: 1, 256>}, {transform_indices = @transform_3, window_bounds = array<i64: 1, 256>}, {transform_indices = @transform_4, window_bounds = array<i64: 1, 256>}, {transform_indices = @transform_5, window_bounds = array<i64: 16, 256>}, {transform_indices = @transform_6, window_bounds = array<i64: 1, 256>}, {transform_indices = @transform_7, window_bounds = array<i64: 1, 256>}]} {
    %c0 = arith.constant 0 : index
    %c0_0 = arith.constant 0 : index
    %0 = vector.load %arg1[%c0, %c0_0] : memref<16x256xf32, #tpu.memory_space<vmem>>, vector<16x256xf32>
    %cst = arith.constant dense<0.000000e+00> : vector<256xf32>
    %1 = vector.multi_reduction <add>, %0, %cst [0] : vector<16x256xf32> to vector<256xf32>
    %2 = vector.shape_cast %1 : vector<256xf32> to vector<1x256xf32>
    %cst_1 = arith.constant 1.600000e+01 : f32
    %3 = vector.broadcast %cst_1 : f32 to vector<1x256xf32>
    %4 = arith.divf %2, %3 : vector<1x256xf32>
    %5 = vector.broadcast %4 : vector<1x256xf32> to vector<16x256xf32>
    %6 = arith.subf %0, %5 : vector<16x256xf32>
    %7 = arith.mulf %6, %6 : vector<16x256xf32>
    %cst_2 = arith.constant dense<0.000000e+00> : vector<256xf32>
    %8 = vector.multi_reduction <add>, %7, %cst_2 [0] : vector<16x256xf32> to vector<256xf32>
    %9 = vector.shape_cast %8 : vector<256xf32> to vector<1x256xf32>
    %cst_3 = arith.constant 1.600000e+01 : f32
    %10 = vector.broadcast %cst_3 : f32 to vector<1x256xf32>
    %11 = arith.divf %9, %10 : vector<1x256xf32>
    %cst_4 = arith.constant 9.99999974E-6 : f32
    %12 = vector.broadcast %cst_4 : f32 to vector<1x256xf32>
    %13 = arith.addf %11, %12 : vector<1x256xf32>
    %14 = math.rsqrt %13 : vector<1x256xf32>
    %c0_5 = arith.constant 0 : index
    %c0_6 = arith.constant 0 : index
    %15 = vector.load %arg2[%c0_5, %c0_6] : memref<1x256xf32, #tpu.memory_space<vmem>>, vector<1x256xf32>
    %16 = math.exp %15 : vector<1x256xf32>
    %17 = arith.mulf %16, %14 : vector<1x256xf32>
    %c0_7 = arith.constant 0 : index
    %c0_8 = arith.constant 0 : index
    %18 = vector.load %arg3[%c0_7, %c0_8] : memref<1x256xf32, #tpu.memory_space<vmem>>, vector<1x256xf32>
    %19 = arith.mulf %4, %17 : vector<1x256xf32>
    %20 = arith.subf %18, %19 : vector<1x256xf32>
    %21 = vector.broadcast %17 : vector<1x256xf32> to vector<16x256xf32>
    %22 = arith.mulf %0, %21 : vector<16x256xf32>
    %23 = vector.broadcast %20 : vector<1x256xf32> to vector<16x256xf32>
    %24 = arith.addf %22, %23 : vector<16x256xf32>
    %c0_9 = arith.constant 0 : index
    %c0_10 = arith.constant 0 : index
    %25 = vector.load %arg6[%c0_9, %c0_10] : memref<16x256xf32, #tpu.memory_space<vmem>>, vector<16x256xf32>
    tpu.vector_store %arg6[%c0_9, %c0_10], %24 {strides = array<i32>} : memref<16x256xf32, #tpu.memory_space<vmem>>, vector<16x256xf32>,
    %c0_11 = arith.constant 0 : index
    %c0_12 = arith.constant 0 : index
    %26 = vector.load %arg4[%c0_11, %c0_12] : memref<1x256xf32, #tpu.memory_space<vmem>>, vector<1x256xf32>
    %cst_13 = arith.constant 0.899999976 : f32
    %27 = vector.broadcast %cst_13 : f32 to vector<1x256xf32>
    %28 = arith.mulf %27, %26 : vector<1x256xf32>
    %cst_14 = arith.constant 1.000000e-01 : f32
    %29 = vector.broadcast %cst_14 : f32 to vector<1x256xf32>
    %30 = arith.mulf %29, %4 : vector<1x256xf32>
    %31 = arith.addf %28, %30 : vector<1x256xf32>
    %c0_15 = arith.constant 0 : index
    %c0_16 = arith.constant 0 : index
    %32 = vector.load %arg7[%c0_15, %c0_16] : memref<1x256xf32, #tpu.memory_space<vmem>>, vector<1x256xf32>
    tpu.vector_store %arg7[%c0_15, %c0_16], %31 {strides = array<i32>} : memref<1x256xf32, #tpu.memory_space<vmem>>, vector<1x256xf32>,
    %c0_17 = arith.constant 0 : index
    %c0_18 = arith.constant 0 : index
    %33 = vector.load %arg5[%c0_17, %c0_18] : memref<1x256xf32, #tpu.memory_space<vmem>>, vector<1x256xf32>
    %cst_19 = arith.constant 0.899999976 : f32
    %34 = vector.broadcast %cst_19 : f32 to vector<1x256xf32>
    %35 = arith.mulf %34, %33 : vector<1x256xf32>
    %cst_20 = arith.constant 1.000000e-01 : f32
    %36 = vector.broadcast %cst_20 : f32 to vector<1x256xf32>
    %37 = arith.mulf %36, %11 : vector<1x256xf32>
    %38 = arith.addf %35, %37 : vector<1x256xf32>
    %c0_21 = arith.constant 0 : index
    %c0_22 = arith.constant 0 : index
    %39 = vector.load %arg8[%c0_21, %c0_22] : memref<1x256xf32, #tpu.memory_space<vmem>>, vector<1x256xf32>
    tpu.vector_store %arg8[%c0_21, %c0_22], %38 {strides = array<i32>} : memref<1x256xf32, #tpu.memory_space<vmem>>, vector<1x256xf32>,
    return
  }
  func.func @transform_0(%arg0: i32) -> (i32, i32) {
    %c0_i32 = arith.constant 0 : i32
    %c0_i32_0 = arith.constant 0 : i32
    return %c0_i32, %arg0 : i32, i32
  }
  func.func @transform_1(%arg0: i32) -> (i32, i32) {
    %c0_i32 = arith.constant 0 : i32
    %c0_i32_0 = arith.constant 0 : i32
    return %c0_i32, %arg0 : i32, i32
  }
  func.func @transform_2(%arg0: i32) -> (i32, i32) {
    %c0_i32 = arith.constant 0 : i32
    %c0_i32_0 = arith.constant 0 : i32
    return %c0_i32, %arg0 : i32, i32
  }
  func.func @transform_3(%arg0: i32) -> (i32, i32) {
    %c0_i32 = arith.constant 0 : i32
    %c0_i32_0 = arith.constant 0 : i32
    return %c0_i32, %arg0 : i32, i32
  }
  func.func @transform_4(%arg0: i32) -> (i32, i32) {
    %c0_i32 = arith.constant 0 : i32
    %c0_i32_0 = arith.constant 0 : i32
    return %c0_i32, %arg0 : i32, i32
  }
  func.func @transform_5(%arg0: i32) -> (i32, i32) {
    %c0_i32 = arith.constant 0 : i32
    %c0_i32_0 = arith.constant 0 : i32
    return %c0_i32, %arg0 : i32, i32
  }
  func.func @transform_6(%arg0: i32) -> (i32, i32) {
    %c0_i32 = arith.constant 0 : i32
    %c0_i32_0 = arith.constant 0 : i32
    return %c0_i32, %arg0 : i32, i32
  }
  func.func @transform_7(%arg0: i32) -> (i32, i32) {
    %c0_i32 = arith.constant 0 : i32
    %c0_i32_0 = arith.constant 0 : i32
    return %c0_i32, %arg0 : i32, i32
  }
}

</mosaic_0001>

<llo_original>
// kernel: tpu_custom_call.1
$region0: #{tpu_custom_call.1}
  #allocation0 [shape = 'u32[]', space=smem, size = 0x4, offset = 0x4, fixed_abs, tag = 'smem constant byte address 0x4 - core index']
  #allocation1 [shape = 'u32[144,128]{1,0:T(1,128)}', space=vmem, size = 0x12000, scoped, tag = 'internal scratch']
  %s0 = inlined_call_operand.hbm [shape: f32[16,256], index: 0, kind: input, shape index: {}]
  %s1 = inlined_call_operand.vmem [shape: f32[1,256], index: 1, kind: input, shape index: {}]
  %s2 = inlined_call_operand.vmem [shape: f32[1,256], index: 2, kind: input, shape index: {}]
  %s3 = inlined_call_operand.vmem [shape: f32[1,256], index: 3, kind: input, shape index: {}]
  %s4 = inlined_call_operand.vmem [shape: f32[1,256], index: 4, kind: input, shape index: {}]
  %s5 = inlined_call_operand.hbm [shape: f32[16,256], index: 5, kind: output, shape index: {0}]
  %s6 = inlined_call_operand.hbm [shape: f32[1,256], index: 6, kind: output, shape index: {1}]
  %s7 = inlined_call_operand.hbm [shape: f32[1,256], index: 7, kind: output, shape index: {2}]
  %8 = xla_tuple %s5, %s6, %s7
  %s9 = sld [smem:[#allocation0]]
  $region50: #{tpu_custom_call.1} parent=0
    _
  %s11 = ssub.s32 1, %s9
  %s12 = scalar_select 0, %s11, %s9
  $region1: #{tpu_custom_call.1} parent=0
    #allocation2 [shape = 'u8[16384]{0}', space=vmem, size = 0x4000, scoped, tag = 'input window, operand 0, single buffered']
    #allocation3 [shape = 's32[1]{0}', space=sflag, size = 0x4, scoped, tag = 'scoped memory for tpu_custom_call.1']
    #allocation4 [shape = 's32[1]{0}', space=sflag, size = 0x4, scoped, tag = 'scoped memory for tpu_custom_call.1']
    #allocation5 [shape = 'u8[16384]{0}', space=vmem, size = 0x4000, scoped, tag = 'output window, operand 0, single buffered']
    #allocation6 [shape = 'u8[1024]{0}', space=vmem, size = 0x400, scoped, tag = 'output window, operand 1, single buffered']
    #allocation7 [shape = 's32[1]{0}', space=sflag, size = 0x4, scoped, tag = 'scoped memory for tpu_custom_call.1']
    #allocation8 [shape = 'u8[1024]{0}', space=vmem, size = 0x400, scoped, tag = 'output window, operand 2, single buffered']
    %13 = vsyncpa [#allocation3], 0
    %14 = vsyncpa [#allocation4], 0
    %15 = vsyncpa [#allocation7], 0
    // Predicated region
    $region2: #{tpu_custom_call.1} parent=1 // pred_check
      _
    $region3: #{tpu_custom_call.1} parent=1 // pred_check_branch
      %17 = sbr.rel (0) target = $region5
    $region4: #{tpu_custom_call.1} parent=1 // pred_region
      %s19 = ssub.s32 512, 512
      %20 = vsyncadd [#allocation3], %s19
      %s21 = sshll.u32 [#allocation2], 4
      %s22 = int_to_ptr.vmem [resolvable:$true] %s21
      %27 = dma.hbm_to_vmem [thread:$0]  %s0, 512, %s22, [#allocation3], 256, 256, 16
    $region5: #{tpu_custom_call.1} parent=1 // pred_fallthru
      _
    // Predicated region
    $region6: #{tpu_custom_call.1} parent=1 // pred_check
      _
    $region7: #{tpu_custom_call.1} parent=1 // pred_check_branch
      %29 = sbr.rel (0) target = $region9
    $region8: #{tpu_custom_call.1} parent=1 // pred_region
      _
    $region9: #{tpu_custom_call.1} parent=1 // pred_fallthru
      _
    // Predicated region
    $region10: #{tpu_custom_call.1} parent=1 // pred_check
      _
    $region11: #{tpu_custom_call.1} parent=1 // pred_check_branch
      %31 = sbr.rel (0) target = $region13
    $region12: #{tpu_custom_call.1} parent=1 // pred_region
      _
    $region13: #{tpu_custom_call.1} parent=1 // pred_fallthru
      _
    // Predicated region
    $region14: #{tpu_custom_call.1} parent=1 // pred_check
      _
    $region15: #{tpu_custom_call.1} parent=1 // pred_check_branch
      %33 = sbr.rel (0) target = $region17
    $region16: #{tpu_custom_call.1} parent=1 // pred_region
      _
    $region17: #{tpu_custom_call.1} parent=1 // pred_fallthru
      _
    // Predicated region
    $region18: #{tpu_custom_call.1} parent=1 // pred_check
      _
    $region19: #{tpu_custom_call.1} parent=1 // pred_check_branch
      %35 = sbr.rel (0) target = $region21
    $region20: #{tpu_custom_call.1} parent=1 // pred_region
      _
    $region21: #{tpu_custom_call.1} parent=1 // pred_fallthru
      _
    // Predicated region
    $region22: #{tpu_custom_call.1} parent=1 // pred_check
      _
    $region23: #{tpu_custom_call.1} parent=1 // pred_check_branch
      %37 = sbr.rel (0) target = $region25
    $region24: #{tpu_custom_call.1} parent=1 // pred_region
      %38 = dma.done [#allocation3], 512
    $region25: #{tpu_custom_call.1} parent=1 // pred_fallthru
      _
    %v39 = vld [vmem:[#allocation2] sm:$0xff]
    %v40 = vld [vmem:[#allocation2 + $0x8] sm:$0xff]
    %v41 = vld [vmem:[#allocation2 + $0x10] sm:$0xff]
    %v42 = vld [vmem:[#allocation2 + $0x18] sm:$0xff]
    %v43 = vadd.f32 %v39, %v41
    %v44 = vrot.slane %v43, 4
    %v45 = vadd.f32 %v43, %v44
    %v46 = vrot.slane %v45, 2
    %v47 = vadd.f32 %v45, %v46
    %v48 = vrot.slane %v47, 1
    %v49 = vadd.f32 %v47, %v48
    %v50 = vadd.f32 %v40, %v42
    %v51 = vrot.slane %v50, 4
    %v52 = vadd.f32 %v50, %v51
    %v53 = vrot.slane %v52, 2
    %v54 = vadd.f32 %v52, %v53
    %v55 = vrot.slane %v54, 1
    %v56 = vadd.f32 %v54, %v55
    %v57 = vrcp.pop 16.0
    %v58 = vmul.f32 %v49, %v57
    %v59 = vmul.f32 %v56, %v57
    %v60 = vsub.f32 %v39, %v58
    %v61 = vsub.f32 %v40, %v59
    %v62 = vsub.f32 %v41, %v58
    %v63 = vsub.f32 %v42, %v59
    %v64 = vmul.f32 %v60, %v60
    %v65 = vmul.f32 %v61, %v61
    %v66 = vmul.f32 %v62, %v62
    %v67 = vmul.f32 %v63, %v63
    %v68 = vadd.f32 %v64, %v66
    %v69 = vrot.slane %v68, 4
    %v70 = vadd.f32 %v68, %v69
    %v71 = vrot.slane %v70, 2
    %v72 = vadd.f32 %v70, %v71
    %v73 = vrot.slane %v72, 1
    %v74 = vadd.f32 %v72, %v73
    %v75 = vadd.f32 %v65, %v67
    %v76 = vrot.slane %v75, 4
    %v77 = vadd.f32 %v75, %v76
    %v78 = vrot.slane %v77, 2
    %v79 = vadd.f32 %v77, %v78
    %v80 = vrot.slane %v79, 1
    %v81 = vadd.f32 %v79, %v80
    %v82 = vmul.f32 %v74, %v57
    %v83 = vmul.f32 %v81, %v57
    %v84 = vadd.f32 %v82, 1e-05
    %v85 = vadd.f32 %v83, 1e-05
    %v86 = vrsqrt.pop %v84
    %v87 = vrsqrt.pop %v85
    %v88 = vld [vmem:[%s1] sm:$0x3]
    %v89 = vmul.f32 %v88, 1.442695
    %v90 = vpow.pop %v89
    %v93 = vcombine.low %v86, %v87
    %v95 = vunpack.c.l.s4 1966171168
    %v96 = vunpack.c.0.s8 %v95
    %v97 = vlaneseq
    %v98 = vshrl.u32 %v97, 7
    %v99 = vsub.s32 %v96, %v98
    %v100 = vrot.slane %v93, %v99
    %v102 = vunpack.c.l.s4 1966171168
    %v103 = vunpack.c.0.s8 %v102
    %v104 = vlaneseq
    %v105 = vshrl.u32 %v104, 7
    %v106 = vsub.s32 %v103, %v105
    %v107 = vrot.slane %v100, %v106
    %v109 = vmul.f32 %v90, %v107
    %v110 = vld [vmem:[%s2] sm:$0x3]
    %v112 = vlaneseq
    %v113 = vshrl.u32 %v112, 7
    %v114 = vsub.s32 0, %v113
    %v115 = vrot.slane %v109, %v114
    %v116 = vlaneseq
    %v117 = vshrl.u32 %v116, 7
    %v118 = vsub.s32 1, %v117
    %v119 = vrot.slane %v109, %v118
    %v122 = vmul.f32 %v58, %v115
    %v123 = vmul.f32 %v59, %v119
    %v126 = vcombine.low %v122, %v123
    %v128 = vunpack.c.l.s4 1966171168
    %v129 = vunpack.c.0.s8 %v128
    %v130 = vlaneseq
    %v131 = vshrl.u32 %v130, 7
    %v132 = vsub.s32 %v129, %v131
    %v133 = vrot.slane %v126, %v132
    %v135 = vunpack.c.l.s4 1966171168
    %v136 = vunpack.c.0.s8 %v135
    %v137 = vlaneseq
    %v138 = vshrl.u32 %v137, 7
    %v139 = vsub.s32 %v136, %v138
    %v140 = vrot.slane %v133, %v139
    %v142 = vsub.f32 %v110, %v140
    %v143 = vmul.f32 %v39, %v115
    %v144 = vmul.f32 %v40, %v119
    %v145 = vmul.f32 %v41, %v115
    %v146 = vmul.f32 %v42, %v119
    %v148 = vlaneseq
    %v149 = vshrl.u32 %v148, 7
    %v150 = vsub.s32 0, %v149
    %v151 = vrot.slane %v142, %v150
    %v152 = vlaneseq
    %v153 = vshrl.u32 %v152, 7
    %v154 = vsub.s32 1, %v153
    %v155 = vrot.slane %v142, %v154
    %v158 = vadd.f32 %v143, %v151
    %v159 = vadd.f32 %v144, %v155
    %v160 = vadd.f32 %v145, %v151
    %v161 = vadd.f32 %v146, %v155
    %162 = vst [vmem:[#allocation5] sm:$0xff] %v158
    %163 = vst [vmem:[#allocation5 + $0x8] sm:$0xff] %v159
    %164 = vst [vmem:[#allocation5 + $0x10] sm:$0xff] %v160
    %165 = vst [vmem:[#allocation5 + $0x18] sm:$0xff] %v161
    %v166 = vld [vmem:[%s3] sm:$0x3]
    %v167 = vmul.f32 %v166, 0.9
    %v168 = vmul.f32 %v58, 0.1
    %v169 = vmul.f32 %v59, 0.1
    %v172 = vcombine.low %v168, %v169
    %v174 = vunpack.c.l.s4 1966171168
    %v175 = vunpack.c.0.s8 %v174
    %v176 = vlaneseq
    %v177 = vshrl.u32 %v176, 7
    %v178 = vsub.s32 %v175, %v177
    %v179 = vrot.slane %v172, %v178
    %v181 = vunpack.c.l.s4 1966171168
    %v182 = vunpack.c.0.s8 %v181
    %v183 = vlaneseq
    %v184 = vshrl.u32 %v183, 7
    %v185 = vsub.s32 %v182, %v184
    %v186 = vrot.slane %v179, %v185
    %v188 = vadd.f32 %v167, %v186
    %v189 = vlaneseq
    %vm190 = vcmp.ge.s32.totalorder %v189, 0
    %vm191 = vcmp.lt.s32.totalorder %v189, 256
    %vm192 = vmand %vm190, %vm191
    %193 = vst.msk [vmem:[#allocation6] sm:$0x3] %vm192, %v188
    %v194 = vld [vmem:[%s4] sm:$0x3]
    %v195 = vmul.f32 %v194, 0.9
    %v196 = vmul.f32 %v82, 0.1
    %v197 = vmul.f32 %v83, 0.1
    %v200 = vcombine.low %v196, %v197
    %v202 = vunpack.c.l.s4 1966171168
    %v203 = vunpack.c.0.s8 %v202
    %v204 = vlaneseq
    %v205 = vshrl.u32 %v204, 7
    %v206 = vsub.s32 %v203, %v205
    %v207 = vrot.slane %v200, %v206
    %v209 = vunpack.c.l.s4 1966171168
    %v210 = vunpack.c.0.s8 %v209
    %v211 = vlaneseq
    %v212 = vshrl.u32 %v211, 7
    %v213 = vsub.s32 %v210, %v212
    %v214 = vrot.slane %v207, %v213
    %v216 = vadd.f32 %v195, %v214
    %217 = vst.msk [vmem:[#allocation8] sm:$0x3] %vm192, %v216
    // Predicated region
    $region26: #{tpu_custom_call.1} parent=1 // pred_check
      _
    $region27: #{tpu_custom_call.1} parent=1 // pred_check_branch
      %219 = sbr.rel (0) target = $region29
    $region28: #{tpu_custom_call.1} parent=1 // pred_region
      %s221 = ssub.s32 512, 512
      %222 = vsyncadd [#allocation4], %s221
      %s223 = sshll.u32 [#allocation5], 4
      %s224 = int_to_ptr.vmem [resolvable:$true] %s223
      %229 = dma.vmem_to_hbm [thread:$0]  %s224, 512, %s5, [#allocation4], 256, 256, 16
    $region29: #{tpu_custom_call.1} parent=1 // pred_fallthru
      _
    // Predicated region
    $region30: #{tpu_custom_call.1} parent=1 // pred_check
      _
    $region31: #{tpu_custom_call.1} parent=1 // pred_check_branch
      %231 = sbr.rel (0) target = $region33
    $region32: #{tpu_custom_call.1} parent=1 // pred_region
      %s233 = ssub.s32 32, 32
      %234 = vsyncadd [#allocation7], %s233
      %s236 = sshll.u32 [#allocation6], 4
      %s237 = int_to_ptr.vmem [resolvable:$true] %s236
      %239 = dma.vmem_to_hbm [thread:$0]  %s237, 32, %s6, [#allocation7]
    $region33: #{tpu_custom_call.1} parent=1 // pred_fallthru
      _
    // Predicated region
    $region34: #{tpu_custom_call.1} parent=1 // pred_check
      _
    $region35: #{tpu_custom_call.1} parent=1 // pred_check_branch
      %241 = sbr.rel (0) target = $region37
    $region36: #{tpu_custom_call.1} parent=1 // pred_region
      %s243 = ssub.s32 32, 32
      %244 = vsyncadd [#allocation7], %s243
      %s246 = sshll.u32 [#allocation8], 4
      %s247 = int_to_ptr.vmem [resolvable:$true] %s246
      %249 = dma.vmem_to_hbm [thread:$0]  %s247, 32, %s7, [#allocation7]
    $region37: #{tpu_custom_call.1} parent=1 // pred_fallthru
      _
    // Predicated region
    $region38: #{tpu_custom_call.1} parent=1 // pred_check
      _
    $region39: #{tpu_custom_call.1} parent=1 // pred_check_branch
      %251 = sbr.rel (0) target = $region41
    $region40: #{tpu_custom_call.1} parent=1 // pred_region
      %252 = dma.done [#allocation4], 512
    $region41: #{tpu_custom_call.1} parent=1 // pred_fallthru
      _
    // Predicated region
    $region42: #{tpu_custom_call.1} parent=1 // pred_check
      _
    $region43: #{tpu_custom_call.1} parent=1 // pred_check_branch
      %254 = sbr.rel (0) target = $region45
    $region44: #{tpu_custom_call.1} parent=1 // pred_region
      %255 = dma.done [#allocation7], 32
    $region45: #{tpu_custom_call.1} parent=1 // pred_fallthru
      _
    // Predicated region
    $region46: #{tpu_custom_call.1} parent=1 // pred_check
      _
    $region47: #{tpu_custom_call.1} parent=1 // pred_check_branch
      %257 = sbr.rel (0) target = $region49
    $region48: #{tpu_custom_call.1} parent=1 // pred_region
      %258 = dma.done [#allocation7], 32
    $region49: #{tpu_custom_call.1} parent=1 // pred_fallthru
      _
    %259 = vsyncpa [#allocation3], 1
    %260 = vsyncpa [#allocation4], 1
    %261 = vsyncpa [#allocation7], 1

</llo_original>
